<compile_context>
chip_gen: v7x
topology: tpu7x:2x2x1
jax: 0.10.0
libtpu: 0.0.40
codegen_flags: <defaults>
</compile_context>

<pallas_src>
import functools

import jax
import jax.numpy as jnp
from jax.experimental import pallas as pl
from jax.experimental.pallas import tpu as pltpu


def _round_up(x, m):
    return -(-x // m) * m


def _pick_tile(num_user, num_item):
    # Larger tiles amortize the ~0.35 us per-grid-step overhead against the
    # tile DMA time; cap at 1024 so residency also fits v7x's 64 MiB VMEM.
    for t in (1024, 512, 256, 128):
        if num_user >= 2 * t and num_item >= 2 * t:
            return t
    return 128


# ---------------------------------------------------------------------------
# Pallas kernel.
#
# grid = (L, nj, nk):
#   i : layer being produced, E^(i+1) = E^(i) @ A     (E stored transposed)
#   j : output column tile (lane dim = nodes; user tiles first, then items)
#   k : reduction tile over the *nonzero* adjacency rows for this column tile
# ---------------------------------------------------------------------------
def _ncl_prop_kernel(nju, nji, ego_ref, adj_ref, emb_ref, cur_ref, dma_sem):
    i = pl.program_id(0)
    j = pl.program_id(1)
    k = pl.program_id(2)
    nk = pl.num_programs(2)
    tk, tn = adj_ref.shape

    # ---- one-time: DMA the (bf16, transposed) ego embeddings into cur[0] --
    @pl.when((i == 0) & (j == 0) & (k == 0))
    def _():
        cp = pltpu.make_async_copy(ego_ref, cur_ref.at[0], dma_sem)
        cp.start()
        cp.wait()

    # ---- zero the f32 output block at the start of each reduction ---------
    # The emb block index (i, 0, j) is constant across k, so the output block
    # stays VMEM-resident for the whole reduction and doubles as accumulator.
    @pl.when(k == 0)
    def _():
        emb_ref[...] = jnp.zeros_like(emb_ref)

    # ---- quadrant-aware reduction ------------------------------------------
    # User output columns (j < nju) only receive contributions from item rows;
    # item output columns only from user rows.  The zero bipartite quadrants
    # are never streamed (adjacency index_map mirrors this); excess trailing k
    # steps repeat the previous block index (no re-DMA) and skip the matmul.
    is_user_col = j < nju
    n_valid = jnp.where(is_user_col, nji, nju)          # nonzero row tiles
    lhs_blk = jnp.minimum(k, n_valid - 1) + jnp.where(is_user_col, nju, 0)
    lhs_off = pl.multiple_of(lhs_blk * tk, tk)

    @pl.when(k < n_valid)
    def _():
        lhs = cur_ref[i % 2, :, pl.ds(lhs_off, tk)]      # (D_pad, tk) bf16
        emb_ref[0, :, :] += jnp.dot(lhs, adj_ref[...],
                                    preferred_element_type=jnp.float32)

    # ---- reduction done: stash bf16 copy as next layer's propagation input -
    @pl.when(k == nk - 1)
    def _():
        j_off = pl.multiple_of(j * tn, tn)
        cur_ref[(i + 1) % 2, :, pl.ds(j_off, tn)] = (
            emb_ref[0, :, :].astype(cur_ref.dtype))


def ncl_forward(norm_adj, ego_embeddings, num_user, num_item, n_layers,
                hyper_layers=1):
    """Pallas implementation of NCL.forward().

    Returns (user_all_embeddings, item_all_embeddings, embeddings_list) with
    embeddings_list stacked along axis 0: shape (L+1, N, dim_E).
    """
    N, D = ego_embeddings.shape
    assert N == num_user + num_item
    L = max(n_layers, hyper_layers * 2)

    # --- tile / padding geometry: users and items are padded to separate
    #     tile-aligned blocks so the bipartite quadrant boundary is aligned ---
    T = _pick_tile(num_user, num_item)
    U_pad = _round_up(num_user, T)
    I_pad = _round_up(num_item, T)
    N_pad = U_pad + I_pad
    D_pad = _round_up(D, 16)                 # bf16 native sublane tile is 16
    nju, nji = U_pad // T, I_pad // T
    nj = nju + nji
    nk = max(nju, nji)

    # --- transposed, lane-dense, quadrant-padded layouts ---------------------
    ego32 = ego_embeddings.astype(jnp.float32)
    ego_t = jnp.zeros((D_pad, N_pad), jnp.float32)
    ego_t = ego_t.at[:D, :num_user].set(ego32[:num_user].T)
    ego_t = ego_t.at[:D, U_pad:U_pad + num_item].set(ego32[num_user:].T)
    ego_bf = ego_t.astype(jnp.bfloat16)

    # Only the nonzero (user-item / item-user) quadrants are materialized; the
    # structurally-zero quadrants stay zero and are never streamed.
    # TODO(synk): for large graphs build only the two off-diagonal blocks in
    #             storage dtype (int8/fp8 with per-tile scales) to also cut
    #             HBM footprint and the dominant A stream further.
    a_ui = norm_adj[:num_user, num_user:].astype(jnp.bfloat16)     # (U, I)
    adj = jnp.zeros((N_pad, N_pad), jnp.bfloat16)
    adj = adj.at[:num_user, U_pad:U_pad + num_item].set(a_ui)
    adj = adj.at[U_pad:U_pad + num_item, :num_user].set(a_ui.T)

    def adj_map(i, j, k):
        is_user_col = j < nju
        n_valid = jnp.where(is_user_col, nji, nju)
        row_blk = jnp.minimum(k, n_valid - 1) + jnp.where(is_user_col, nju, 0)
        return (row_blk, j)

    kernel = functools.partial(_ncl_prop_kernel, nju, nji)

    # VMEM residency budget: double-buffered adjacency tile + ping-pong
    # current-embedding scratch + double-buffered emb output tile (+ headroom).
    vmem_need = (2 * T * T * 2                # adjacency tiles (bf16)
                 + 2 * D_pad * N_pad * 2      # cur ping-pong scratch (bf16)
                 + 2 * D_pad * T * 4)         # emb output tiles (f32)
    vmem_limit = int(min(max(2 * vmem_need, 32 * 1024 * 1024),
                         64 * 1024 * 1024))

    emb_rest_t = pl.pallas_call(
        kernel,
        out_shape=jax.ShapeDtypeStruct((L, D_pad, N_pad), jnp.float32),
        grid_spec=pltpu.PrefetchScalarGridSpec(
            num_scalar_prefetch=0,
            grid=(L, nj, nk),
            in_specs=[
                # ego embeddings stay in HBM; copied once into cur[0]
                pl.BlockSpec(memory_space=pl.ANY),
                # (T, T) bf16 block of the nonzero adjacency quadrant
                pl.BlockSpec((T, T), adj_map),
            ],
            # embeddings_list[i + 1], column tile j (lane-dense f32 store)
            out_specs=pl.BlockSpec((1, D_pad, T), lambda i, j, k: (i, 0, j)),
            scratch_shapes=[
                pltpu.VMEM((2, D_pad, N_pad), jnp.bfloat16),  # cur ping-pong
                pltpu.SemaphoreType.DMA(()),                  # ego copy sem
            ]),
        # TODO(synk): on v7x, shard column tiles across the two TensorCores
        #             (requires streaming E from HBM instead of private scratch).
        compiler_params=pltpu.CompilerParams(
            dimension_semantics=("arbitrary", "arbitrary", "arbitrary"),
            vmem_limit_bytes=vmem_limit),
    )(ego_bf, adj)

    # --- unpad / untranspose back to the PyTorch (N, dim_E) layout -----------
    emb_list_t = jnp.concatenate([ego_t[None], emb_rest_t], axis=0)
    user_part = emb_list_t[:, :D, :num_user]
    item_part = emb_list_t[:, :D, U_pad:U_pad + num_item]
    emb_list = jnp.transpose(
        jnp.concatenate([user_part, item_part], axis=2), (0, 2, 1))  # (L+1,N,D)

    # Layer mean computed outside the kernel (frees the full-size resident
    # mean output block; this extra pass is negligible vs. the A stream).
    mean = jnp.mean(emb_list[:n_layers + 1], axis=0)
    return mean[:num_user], mean[num_user:], emb_list


# ---------------------------------------------------------------------------
# Glue (plain JAX): parameter init + dense normalized adjacency (D A D).
# ---------------------------------------------------------------------------
def xavier_uniform(key, shape):
    fan_out, fan_in = shape
    bound = jnp.sqrt(6.0 / (fan_in + fan_out))
    return jax.random.uniform(key, shape, jnp.float32, -bound, bound)


def build_norm_adj(edge_index, num_user, num_item):
    # edge_index[:, 0] in [0, num_user); edge_index[:, 1] in [num_user, N)
    N = num_user + num_item
    users = edge_index[:, 0]
    items = edge_index[:, 1]
    A = jnp.zeros((N, N), jnp.float32)
    A = A.at[users, items].set(1.0)
    A = A.at[items, users].set(1.0)
    deg = A.sum(axis=1) + 1e-7
    d_inv_sqrt = deg ** -0.5
    return d_inv_sqrt[:, None] * A * d_inv_sqrt[None, :]


# ---------------------------------------------------------------------------
# Demo / correctness check.
# ---------------------------------------------------------------------------
if __name__ == "__main__":
    num_user, num_item = 300, 420          # U_pad=384, I_pad=512 at tile 128
    dim_E = 64
    n_layers = 2
    hyper_layers = 1
    n_edges = 3000

    key = jax.random.PRNGKey(0)
    k_u, k_i, k_eu, k_ei = jax.random.split(key, 4)

    # deterministic synthetic interaction edges (user, item + num_user)
    e_users = jax.random.randint(k_eu, (n_edges,), 0, num_user)
    e_items = jax.random.randint(k_ei, (n_edges,), 0, num_item) + num_user
    edge_index = jnp.stack([e_users, e_items], axis=1)

    user_emb = xavier_uniform(k_u, (num_user, dim_E))
    item_emb = xavier_uniform(k_i, (num_item, dim_E))
    ego = jnp.concatenate([user_emb, item_emb], axis=0)        # (N, dim_E)

    norm_adj = build_norm_adj(edge_index, num_user, num_item)  # (N, N)

    user_all, item_all, emb_list = ncl_forward(
        norm_adj, ego, num_user, num_item, n_layers, hyper_layers)
    jax.block_until_ready((user_all, item_all, emb_list))

    # Reference in plain f32 JAX (mirrors the PyTorch forward exactly).
    L = max(n_layers, hyper_layers * 2)
    ref_list = [ego]
    cur = ego
    for _ in range(L):
        cur = norm_adj @ cur
        ref_list.append(cur)
    ref_stack = jnp.stack(ref_list, axis=0)
    ref_mean = jnp.mean(ref_stack[:n_layers + 1], axis=0)

    # Layer 0 is copied exactly (f32); propagated layers use bf16 MXU operands
    # with f32 accumulation, hence the looser tolerance below.
    assert jnp.allclose(emb_list[0], ego, atol=1e-6)
    assert jnp.allclose(emb_list, ref_stack, atol=1e-2, rtol=5e-2)
    assert jnp.allclose(user_all, ref_mean[:num_user], atol=1e-2, rtol=5e-2)
    assert jnp.allclose(item_all, ref_mean[num_user:], atol=1e-2, rtol=5e-2)

    print("KERNEL_OK")
</pallas_src>

<mosaic_0001>
module attributes {stable_mosaic.version = 11 : i64} {
  func.func @_ncl_prop_kernel(%arg0: i32, %arg1: i32, %arg2: i32, %arg3: memref<64x896xbf16, #tpu.memory_space<any>>, %arg4: memref<128x128xbf16, #tpu.memory_space<vmem>>, %arg5: memref<1x64x128xf32, #tpu.memory_space<vmem>>, %arg6: memref<2x64x896xbf16, #tpu.memory_space<vmem>>, %arg7: memref<!tpu.dma_semaphore, #tpu.memory_space<semaphore_mem>>) attributes {dimension_semantics = [#tpu.dimension_semantics<arbitrary>, #tpu.dimension_semantics<arbitrary>, #tpu.dimension_semantics<arbitrary>], iteration_bounds = array<i64: 2, 7, 4>, scalar_prefetch = 0 : i64, scratch_operands = 2 : i64, tpu.core_type = #tpu.core_type<tc>, window_params = [{}, {transform_indices = @transform_1, window_bounds = array<i64: 128, 128>}, {transform_indices = @transform_2, window_bounds = array<i64: 1, 64, 128>}]} {
    %c0_i32 = arith.constant 0 : i32
    %0 = arith.cmpi eq, %arg0, %c0_i32 : i32
    %c0_i32_0 = arith.constant 0 : i32
    %1 = arith.cmpi eq, %arg1, %c0_i32_0 : i32
    %2 = arith.andi %0, %1 : i1
    %c0_i32_1 = arith.constant 0 : i32
    %3 = arith.cmpi eq, %arg2, %c0_i32_1 : i32
    %4 = arith.andi %2, %3 : i1
    %5 = arith.extui %4 : i1 to i32
    %c0_i32_2 = arith.constant 0 : i32
    %6 = arith.cmpi ne, %5, %c0_i32_2 : i32
    scf.if %6 {
      %c0_i32_11 = arith.constant 0 : i32
      %c0_i32_12 = arith.constant 0 : i32
      %c0_i32_13 = arith.constant 0 : i32
      %24 = tpu.memref_slice %arg6[%c0_i32_11, %c0_i32_12, %c0_i32_13] : memref<2x64x896xbf16, #tpu.memory_space<vmem>> -> memref<1x64x896xbf16, #tpu.memory_space<vmem>>
      %25 = tpu.memref_squeeze %24 : memref<1x64x896xbf16, #tpu.memory_space<vmem>> -> memref<64x896xbf16, #tpu.memory_space<vmem>>
      tpu.enqueue_dma source(%arg3 : memref<64x896xbf16, #tpu.memory_space<any>>) target(%25 : memref<64x896xbf16, #tpu.memory_space<vmem>>) target_semaphore(%arg7 : memref<!tpu.dma_semaphore, #tpu.memory_space<semaphore_mem>>)
      %c0_i32_14 = arith.constant 0 : i32
      %c0_i32_15 = arith.constant 0 : i32
      %c0_i32_16 = arith.constant 0 : i32
      %26 = tpu.memref_slice %arg6[%c0_i32_14, %c0_i32_15, %c0_i32_16] : memref<2x64x896xbf16, #tpu.memory_space<vmem>> -> memref<1x64x896xbf16, #tpu.memory_space<vmem>>
      %27 = tpu.memref_squeeze %26 : memref<1x64x896xbf16, #tpu.memory_space<vmem>> -> memref<64x896xbf16, #tpu.memory_space<vmem>>
      tpu.wait_dma2 semaphore(%arg7 : memref<!tpu.dma_semaphore, #tpu.memory_space<semaphore_mem>>) src(%arg3 : memref<64x896xbf16, #tpu.memory_space<any>>) dst(%27 : memref<64x896xbf16, #tpu.memory_space<vmem>>)
    } else {
    }
    %c0_i32_3 = arith.constant 0 : i32
    %7 = arith.cmpi eq, %arg2, %c0_i32_3 : i32
    %8 = arith.extui %7 : i1 to i32
    %c0_i32_4 = arith.constant 0 : i32
    %9 = arith.cmpi ne, %8, %c0_i32_4 : i32
    scf.if %9 {
      %cst = arith.constant 0.000000e+00 : f32
      %24 = vector.broadcast %cst : f32 to vector<1x64x128xf32>
      %c0 = arith.constant 0 : index
      %c0_11 = arith.constant 0 : index
      %c0_12 = arith.constant 0 : index
      %25 = vector.load %arg5[%c0, %c0_11, %c0_12] : memref<1x64x128xf32, #tpu.memory_space<vmem>>, vector<1x64x128xf32>
      tpu.vector_store %arg5[%c0, %c0_11, %c0_12], %24 {strides = array<i32>} : memref<1x64x128xf32, #tpu.memory_space<vmem>>, vector<1x64x128xf32>,
    } else {
    }
    %c3_i32 = arith.constant 3 : i32
    %10 = arith.cmpi slt, %arg1, %c3_i32 : i32
    %c4_i32 = arith.constant 4 : i32
    %c3_i32_5 = arith.constant 3 : i32
    %11 = arith.select %10, %c4_i32, %c3_i32_5 : i32
    %c1_i32 = arith.constant 1 : i32
    %12 = arith.subi %11, %c1_i32 : i32
    %13 = arith.minsi %arg2, %12 : i32
    %c3_i32_6 = arith.constant 3 : i32
    %c0_i32_7 = arith.constant 0 : i32
    %14 = arith.select %10, %c3_i32_6, %c0_i32_7 : i32
    %15 = arith.addi %13, %14 : i32
    %c128_i32 = arith.constant 128 : i32
    %16 = arith.muli %15, %c128_i32 : i32
    %17 = tpu.assume_multiple %16, 128 : i32
    %18 = arith.cmpi slt, %arg2, %11 : i32
    %19 = arith.extui %18 : i1 to i32
    %c0_i32_8 = arith.constant 0 : i32
    %20 = arith.cmpi ne, %19, %c0_i32_8 : i32
    scf.if %20 {
      %c2_i32 = arith.constant 2 : i32
      %c0_i32_11 = arith.constant 0 : i32
      %24 = arith.cmpi eq, %c2_i32, %c0_i32_11 : i32
      %c1_i32_12 = arith.constant 1 : i32
      %25 = arith.select %24, %c1_i32_12, %c2_i32 : i32
      %26 = arith.remsi %arg0, %25 : i32
      %c0_i32_13 = arith.constant 0 : i32
      %27 = arith.cmpi ne, %26, %c0_i32_13 : i32
      %c0_i32_14 = arith.constant 0 : i32
      %28 = arith.cmpi slt, %26, %c0_i32_14 : i32
      %c0_i32_15 = arith.constant 0 : i32
      %29 = arith.cmpi slt, %25, %c0_i32_15 : i32
      %30 = arith.xori %28, %29 : i1
      %31 = arith.andi %30, %27 : i1
      %32 = arith.addi %26, %25 : i32
      %33 = arith.select %31, %32, %26 : i32
      %34 = arith.index_cast %33 : i32 to index
      %c0 = arith.constant 0 : index
      %35 = arith.index_cast %17 : i32 to index
      %36 = vector.load %arg6[%34, %c0, %35] : memref<2x64x896xbf16, #tpu.memory_space<vmem>>, vector<1x64x128xbf16>
      %37 = vector.shape_cast %36 : vector<1x64x128xbf16> to vector<64x128xbf16>
      %c0_16 = arith.constant 0 : index
      %c0_17 = arith.constant 0 : index
      %c0_18 = arith.constant 0 : index
      %38 = vector.load %arg5[%c0_16, %c0_17, %c0_18] : memref<1x64x128xf32, #tpu.memory_space<vmem>>, vector<1x64x128xf32>
      %39 = vector.shape_cast %38 : vector<1x64x128xf32> to vector<64x128xf32>
      %c0_19 = arith.constant 0 : index
      %c0_20 = arith.constant 0 : index
      %40 = vector.load %arg4[%c0_19, %c0_20] : memref<128x128xbf16, #tpu.memory_space<vmem>>, vector<128x128xbf16>
      %cst = arith.constant dense<0.000000e+00> : vector<64x128xf32>
      %41 = tpu.matmul %37, %40, %cst {dimension_numbers = #tpu.dot_dimension_numbers<[1], [0], [0], [1], [0, 0, 1, 1], [], []>} : vector<64x128xbf16>, vector<128x128xbf16>, vector<64x128xf32> -> vector<64x128xf32>
      %42 = arith.addf %39, %41 : vector<64x128xf32>
      %c0_21 = arith.constant 0 : index
      %c0_22 = arith.constant 0 : index
      %c0_23 = arith.constant 0 : index
      %43 = vector.load %arg5[%c0_21, %c0_22, %c0_23] : memref<1x64x128xf32, #tpu.memory_space<vmem>>, vector<1x64x128xf32>
      %44 = vector.shape_cast %43 : vector<1x64x128xf32> to vector<64x128xf32>
      %45 = vector.shape_cast %42 : vector<64x128xf32> to vector<1x64x128xf32>
      tpu.vector_store %arg5[%c0_21, %c0_22, %c0_23], %45 {strides = array<i32>} : memref<1x64x128xf32, #tpu.memory_space<vmem>>, vector<1x64x128xf32>,
    } else {
    }
    %c3_i32_9 = arith.constant 3 : i32
    %21 = arith.cmpi eq, %arg2, %c3_i32_9 : i32
    %22 = arith.extui %21 : i1 to i32
    %c0_i32_10 = arith.constant 0 : i32
    %23 = arith.cmpi ne, %22, %c0_i32_10 : i32
    scf.if %23 {
      %c128_i32_11 = arith.constant 128 : i32
      %24 = arith.muli %arg1, %c128_i32_11 : i32
      %25 = tpu.assume_multiple %24, 128 : i32
      %c0 = arith.constant 0 : index
      %c0_12 = arith.constant 0 : index
      %c0_13 = arith.constant 0 : index
      %26 = vector.load %arg5[%c0, %c0_12, %c0_13] : memref<1x64x128xf32, #tpu.memory_space<vmem>>, vector<1x64x128xf32>
      %27 = vector.shape_cast %26 : vector<1x64x128xf32> to vector<64x128xf32>
      %28 = arith.truncf %27 : vector<64x128xf32> to vector<64x128xbf16>
      %c1_i32_14 = arith.constant 1 : i32
      %29 = arith.addi %arg0, %c1_i32_14 : i32
      %c2_i32 = arith.constant 2 : i32
      %c0_i32_15 = arith.constant 0 : i32
      %30 = arith.cmpi eq, %c2_i32, %c0_i32_15 : i32
      %c1_i32_16 = arith.constant 1 : i32
      %31 = arith.select %30, %c1_i32_16, %c2_i32 : i32
      %32 = arith.remsi %29, %31 : i32
      %c0_i32_17 = arith.constant 0 : i32
      %33 = arith.cmpi ne, %32, %c0_i32_17 : i32
      %c0_i32_18 = arith.constant 0 : i32
      %34 = arith.cmpi slt, %32, %c0_i32_18 : i32
      %c0_i32_19 = arith.constant 0 : i32
      %35 = arith.cmpi slt, %31, %c0_i32_19 : i32
      %36 = arith.xori %34, %35 : i1
      %37 = arith.andi %36, %33 : i1
      %38 = arith.addi %32, %31 : i32
      %39 = arith.select %37, %38, %32 : i32
      %40 = arith.index_cast %39 : i32 to index
      %c0_20 = arith.constant 0 : index
      %41 = arith.index_cast %25 : i32 to index
      %42 = vector.load %arg6[%40, %c0_20, %41] : memref<2x64x896xbf16, #tpu.memory_space<vmem>>, vector<1x64x128xbf16>
      %43 = vector.shape_cast %42 : vector<1x64x128xbf16> to vector<64x128xbf16>
      %44 = vector.shape_cast %28 : vector<64x128xbf16> to vector<1x64x128xbf16>
      tpu.vector_store %arg6[%40, %c0_20, %41], %44 {strides = array<i32>} : memref<2x64x896xbf16, #tpu.memory_space<vmem>>, vector<1x64x128xbf16>,
    } else {
    }
    return
  }
  func.func @transform_1(%arg0: i32, %arg1: i32, %arg2: i32) -> (i32, i32) {
    %c3_i32 = arith.constant 3 : i32
    %0 = arith.cmpi slt, %arg1, %c3_i32 : i32
    %c4_i32 = arith.constant 4 : i32
    %c3_i32_0 = arith.constant 3 : i32
    %1 = arith.select %0, %c4_i32, %c3_i32_0 : i32
    %c1_i32 = arith.constant 1 : i32
    %2 = arith.subi %1, %c1_i32 : i32
    %3 = arith.minsi %arg2, %2 : i32
    %c3_i32_1 = arith.constant 3 : i32
    %c0_i32 = arith.constant 0 : i32
    %4 = arith.select %0, %c3_i32_1, %c0_i32 : i32
    %5 = arith.addi %3, %4 : i32
    %c0_i32_2 = arith.constant 0 : i32
    return %5, %arg1 : i32, i32
  }
  func.func @transform_2(%arg0: i32, %arg1: i32, %arg2: i32) -> (i32, i32, i32) {
    %c0_i32 = arith.constant 0 : i32
    %c0_i32_0 = arith.constant 0 : i32
    return %arg0, %c0_i32, %arg1 : i32, i32, i32
  }
}

</mosaic_0001>

<llo_original>
// kernel: tpu_custom_call.1
$region0: #{tpu_custom_call.1}
  #allocation0 [shape = 'u32[]', space=smem, size = 0x4, offset = 0x4, fixed_abs, tag = 'smem constant byte address 0x4 - core index']
  #allocation1 [shape = 'u32[144,128]{1,0:T(1,128)}', space=vmem, size = 0x12000, scoped, tag = 'internal scratch']
  #allocation2 [shape = 'bf16[2,64,896]{2,1,0:T(16,128)(2,1)}', space=vmem, size = 0x38000, scoped, tag = 'scratch operand']
  #allocation3 [shape = 's32[1]{0}', space=sflag, size = 0x4, scoped, tag = 'scratch operand']
  #allocation8 [shape = 's32[]', space=sflag, size = 0x4, offset = 0, fixed_abs, tag = 'sflag constant byte address 0x0 - dummy sync flag']
  %s0 = inlined_call_operand.hbm [shape: bf16[64,896], index: 0, kind: input, shape index: {}]
  %s1 = inlined_call_operand.hbm [shape: bf16[896,896], index: 1, kind: input, shape index: {}]
  %s2 = inlined_call_operand.hbm [shape: f32[2,64,896], index: 2, kind: output, shape index: {}]
  %s3 = sld [smem:[#allocation0]]
  $region57: #{tpu_custom_call.1} parent=0
    _
  %s5 = ssub.s32 1, %s3
  %s6 = scalar_select 0, %s5, %s3
  $region1: #{tpu_custom_call.1} parent=0
    #allocation4 [shape = 'u8[65536]{0}', space=vmem, size = 0x10000, scoped, tag = 'input window, operand 1']
    #allocation5 [shape = 's32[2]{0}', space=sflag, size = 0x8, scoped, tag = 'scoped memory for tpu_custom_call.1']
    #allocation6 [shape = 's32[2]{0}', space=sflag, size = 0x8, scoped, tag = 'scoped memory for tpu_custom_call.1']
    #allocation7 [shape = 'u8[65536]{0}', space=vmem, size = 0x10000, scoped, tag = 'output window, operand 0']
    %7 = vsyncpa [#allocation5], 0
    %s8 = scalar_lea.sflag [#allocation5], 1
    %9 = vsyncpa %s8, 0
    %10 = vsyncpa [#allocation6], 0
    %s11 = scalar_lea.sflag [#allocation6], 1
    %12 = vsyncpa %s11, 0
    loop: start=0, step=1, limit=58
    $region2: #{tpu_custom_call.1} parent=1 // loop_pre_header
      _
    $region3: #{tpu_custom_call.1} parent=1 // loop_header
      %s14 = sphi 0, %s18
      %p15 = scmp.ge.s32.totalorder %s14, 58
      %s21 = sphi 0, %s40
      %s22 = sphi 0, %s36
      %s23 = sphi 0, %s32
      %s24 = sphi 0, %s21
      %s25 = sphi 0, %s22
      %s26 = sphi 0, %s23
      %s27 = sphi 0, %s24
      %s28 = sphi 0, %s25
      %s29 = sphi 0, %s26
      %s59 = sphi 0, %s61
      %s62 = sphi 0, %s59
      %s63 = sphi 0, %s62
      %s79 = sphi 0, %s63
      %s87 = sphi 0, %s89
      %s90 = sphi 0, %s87
      %s91 = sphi 0, %s90
      %s107 = sphi 0, %s91
    $region4: #{tpu_custom_call.1} parent=1 // loop_header_branch
      %17 = sbr.rel (%p15) target = $region8
    $region5: #{tpu_custom_call.1} parent=1 // loop_body
      %s19 = ssub.s32 %s14, 1
      %s20 = ssub.s32 %s14, 2
      %s30 = sadd.s32 1, %s23
      %p31 = scmp.ge.s32.totalorder %s30, 4
      %s32 = scalar_select %p31, 0, %s30
      %s33 = sadd.s32 1, %s22
      %s34 = scalar_select %p31, %s33, %s22
      %p35 = scmp.ge.s32.totalorder %s34, 7
      %s36 = scalar_select %p35, 0, %s34
      %s37 = sadd.s32 1, %s21
      %s38 = scalar_select %p35, %s37, %s21
      %p39 = scmp.ge.s32.totalorder %s38, 2
      %s40 = scalar_select %p39, 0, %s38
      %p41 = scmp.lt.s32.totalorder %s22, 3
      %s42 = scalar_select %p41, 4, 3
      %s43 = ssub.s32 %s42, 1
      %p44 = scmp.lt.s32.totalorder %s23, %s43
      %s45 = scalar_select %p44, %s23, %s43
      %s46 = scalar_select %p41, 3, 0
      %s47 = sadd.s32 %s45, %s46
      %p48 = scmp.lt.s32.totalorder %s36, 3
      %s49 = scalar_select %p48, 4, 3
      %s50 = ssub.s32 %s49, 1
      %p51 = scmp.lt.s32.totalorder %s32, %s50
      %s52 = scalar_select %p51, %s32, %s50
      %s53 = scalar_select %p48, 3, 0
      %s54 = sadd.s32 %s52, %s53
      %s55 = ssub.s32 %s47, %s54
      %s56 = ssub.s32 %s22, %s36
      %s57 = sor.u32 %s55, %s56
      %p58 = scmp.eq.s32.totalorder %s57, 0
      %s60 = sadd.s32 %s59, 1
      %s61 = scalar_select %p58, %s59, %s60
      %p64 = pneg %p58
      %p65 = scmp.eq.s32.totalorder %s14, 55
      %p66 = por %p64, %p65
      %p67 = scmp.ne.s32.totalorder %s59, %s62
      %p68 = scmp.eq.s32.totalorder %s14, 0
      %p69 = por %p67, %p68
      %p70 = scmp.ne.s32.totalorder %s59, %s62
      %p71 = scmp.eq.s32.totalorder %s19, 55
      %p72 = por %p70, %p71
      %p73 = scmp.ne.s32.totalorder %s62, %s63
      %p74 = scmp.eq.s32.totalorder %s19, 0
      %p75 = por %p73, %p74
      %p76 = scmp.ne.s32.totalorder %s62, %s63
      %p77 = scmp.eq.s32.totalorder %s20, 55
      %p78 = por %p76, %p77
      %p80 = scmp.ne.s32.totalorder %s63, %s79
      %p81 = scmp.eq.s32.totalorder %s20, 0
      %p82 = por %p80, %p81
      %s83 = ssub.s32 %s21, %s40
      %s84 = ssub.s32 %s22, %s36
      %s85 = sor.u32 %s83, %s84
      %p86 = scmp.eq.s32.totalorder %s85, 0
      %s88 = sadd.s32 %s87, 1
      %s89 = scalar_select %p86, %s87, %s88
      %p92 = pneg %p86
      %p93 = scmp.eq.s32.totalorder %s14, 55
      %p94 = por %p92, %p93
      %p95 = scmp.ne.s32.totalorder %s87, %s90
      %p96 = scmp.eq.s32.totalorder %s14, 0
      %p97 = por %p95, %p96
      %p98 = scmp.ne.s32.totalorder %s87, %s90
      %p99 = scmp.eq.s32.totalorder %s19, 55
      %p100 = por %p98, %p99
      %p101 = scmp.ne.s32.totalorder %s90, %s91
      %p102 = scmp.eq.s32.totalorder %s19, 0
      %p103 = por %p101, %p102
      %p104 = scmp.ne.s32.totalorder %s90, %s91
      %p105 = scmp.eq.s32.totalorder %s20, 55
      %p106 = por %p104, %p105
      %p108 = scmp.ne.s32.totalorder %s91, %s107
      %p109 = scmp.eq.s32.totalorder %s20, 0
      %p110 = por %p108, %p109
      %p111 = scmp.le.s32.totalorder 1, %s14
      %p112 = scmp.lt.s32.totalorder %s14, 57
      %p113 = pnand %p111, %p112
      %p114 = pneg %p113
      // Predicated region
      $region9: #{tpu_custom_call.1} parent=5 // pred_check
        _
      $region10: #{tpu_custom_call.1} parent=5 // pred_check_branch
        %116 = sbr.rel (%p113) target = $region12
      $region11: #{tpu_custom_call.1} parent=5 // pred_region
        %s117 = ssub.s32 %s14, 1
      $region12: #{tpu_custom_call.1} parent=5 // pred_fallthru
        _
      %p118 = scmp.lt.s32.totalorder %s14, 56
      // Predicated region
      $region13: #{tpu_custom_call.1} parent=5 // pred_check
        %p119 = pneg %p118
      $region14: #{tpu_custom_call.1} parent=5 // pred_check_branch
        %121 = sbr.rel (%p119) target = $region16
      $region15: #{tpu_custom_call.1} parent=5 // pred_region
        // Predicated region
        $region17: #{tpu_custom_call.1} parent=15 // pred_check
          %p122 = pneg %p69
        $region18: #{tpu_custom_call.1} parent=15 // pred_check_branch
          %124 = sbr.rel (%p122) target = $region20
        $region19: #{tpu_custom_call.1} parent=15 // pred_region
          %s125 = sand.u32 %s59, 1
          %s126 = scalar_lea.sflag [#allocation5], %s125
          %s127 = sand.u32 %s59, 1
          %s128 = smul.addr %s127, 64
          %s129 = scalar_lea.vmem [#allocation4], %s128
          %p130 = scmp.lt.s32.totalorder %s22, 3
          %s131 = scalar_select %p130, 4, 3
          %s132 = ssub.s32 %s131, 1
          %p133 = scmp.lt.s32.totalorder %s23, %s132
          %s134 = scalar_select %p133, %s23, %s132
          %s135 = scalar_select %p130, 3, 0
          %s136 = sadd.s32 %s134, %s135
          %s137 = smul.u32 16, %s136
          %s139 = ssub.s32 1024, 1024
          %140 = vsyncadd %s126, %s139
          %s141 = smul.addr %s137, 7
          %s142 = sadd.s32 %s22, %s141
          %s143 = smul.addr %s142, 64
          %s144 = scalar_lea.hbm %s1, %s143
          %s145 = sshll.u32 %s129, 4
          %s146 = int_to_ptr.vmem [resolvable:$true] %s145
          %151 = dma.hbm_to_vmem [thread:$0]  %s144, 1024, %s146, %s126, 448, 64, 4
        $region20: #{tpu_custom_call.1} parent=15 // pred_fallthru
          _
      $region16: #{tpu_custom_call.1} parent=5 // pred_fallthru
        _
      %p152 = scmp.le.s32.totalorder 1, %s14
      %p153 = scmp.lt.s32.totalorder %s14, 57
      %p154 = pnand %p152, %p153
      %p155 = pneg %p154
      // Predicated region
      $region21: #{tpu_custom_call.1} parent=5 // pred_check
        _
      $region22: #{tpu_custom_call.1} parent=5 // pred_check_branch
        %157 = sbr.rel (%p154) target = $region24
      $region23: #{tpu_custom_call.1} parent=5 // pred_region
        %s158 = ssub.s32 %s14, 1
        %s159 = sand.u32 %s62, 1
        %s160 = scalar_lea.sflag [#allocation5], %s159
        %s161 = sand.u32 %s62, 1
        %s162 = smul.addr %s161, 64
        %s163 = scalar_lea.vmem [#allocation4], %s162
        // Predicated region
        $region25: #{tpu_custom_call.1} parent=23 // pred_check
          %p164 = pneg %p75
        $region26: #{tpu_custom_call.1} parent=23 // pred_check_branch
          %166 = sbr.rel (%p164) target = $region28
        $region27: #{tpu_custom_call.1} parent=23 // pred_region
          %167 = dma.done %s160, 1024
        $region28: #{tpu_custom_call.1} parent=23 // pred_fallthru
          _
        %s168 = sand.u32 %s62, 1
        %s169 = scalar_lea.sflag [#allocation5], %s168
        %s170 = sand.u32 %s62, 1
        %s171 = smul.addr %s170, 64
        %s172 = scalar_lea.vmem [#allocation4], %s171
        %p173 = pneg %p75
        %p174 = pneg %p72
        %p175 = pneg %p103
        %p176 = pneg %p100
        %s177 = sand.u32 %s90, 1
        %s178 = scalar_lea.sflag [#allocation6], %s177
        %s179 = sand.u32 %s90, 1
        %s180 = smul.addr %s179, 64
        %s181 = scalar_lea.vmem [#allocation7], %s180
        %p182 = scmp.lt.s32.totalorder %s25, 3
        %s183 = scalar_select %p182, 4, 3
        %s184 = ssub.s32 %s183, 1
        %p185 = scmp.lt.s32.totalorder %s26, %s184
        %s186 = scalar_select %p185, %s26, %s184
        %s187 = scalar_select %p182, 3, 0
        %s188 = sadd.s32 %s186, %s187
        %s189 = smul.u32 16, %s188
        %p191 = scmp.eq.s32.totalorder %s24, 0
        %p192 = scmp.eq.s32.totalorder %s25, 0
        %p193 = pnand %p191, %p192
        %p194 = pneg %p193
        %p195 = scmp.eq.s32.totalorder %s26, 0
        %p196 = pnand %p194, %p195
        %p197 = pneg %p196
        // Predicated region
        $region29: #{tpu_custom_call.1} parent=23 // pred_check
          _
        $region30: #{tpu_custom_call.1} parent=23 // pred_check_branch
          %199 = sbr.rel (%p196) target = $region32
        $region31: #{tpu_custom_call.1} parent=23 // pred_region
          #allocation9 [shape = 'u32[9]{0}', space=smem, size = 0x24, scoped, tag = 'DMA stride descriptor']
          %s201 = sshll.u32 1, 14
          %s202 = sxor.u32 4294967295, %s201
          %s204 = sld [smem:[#allocation0]]
          %s205 = sadd.s32 2, %s204
          %s207 = sshll.u32 7, 26
          %s208 = sxor.u32 4294967295, %s207
          %s209 = sand.u32 0, %s208
          %s210 = sshll.u32 %s205, 26
          %s211 = sor.u32 %s209, %s210
          %s212 = sshll.u32 [#allocation2], 4
          %s213 = int_to_ptr.vmem [resolvable:$true] %s212
          %216 = sst [smem:[#allocation9]] 896
          %s217 = scalar_lea.smem [#allocation9], 1
          %218 = sst [smem:[%s217]] 896
          %s219 = scalar_lea.smem [#allocation9], 2
          %220 = sst [smem:[%s219]] 7
          %s221 = scalar_lea.smem [#allocation9], 3
          %222 = sst [smem:[%s221]] 64
          %s223 = scalar_lea.smem [#allocation9], 4
          %224 = sst [smem:[%s223]] 128
          %s225 = scalar_lea.smem [#allocation9], 5
          %226 = sst [smem:[%s225]] 2
          %s227 = scalar_lea.smem [#allocation9], 6
          %228 = sst [smem:[%s227]] 448
          %s229 = scalar_lea.smem [#allocation9], 7
          %230 = sst [smem:[%s229]] 64
          %s231 = scalar_lea.smem [#allocation9], 8
          %232 = sst [smem:[%s231]] 4
          %234 = dma.general %s0, 3584, %s213, [#allocation3], [#allocation8], [#allocation9], %s211, 0
          %s235 = smul.u32 4, 8
          %s236 = smul.u32 %s235, 7
          %s237 = sshll.u32 %s236, 4
          %238 = dma.done [#allocation3], %s237
        $region32: #{tpu_custom_call.1} parent=23 // pred_fallthru
          _
        // Predicated region
        $region33: #{tpu_custom_call.1} parent=23 // pred_check
          %p239 = pneg %p195
        $region34: #{tpu_custom_call.1} parent=23 // pred_check_branch
          %241 = sbr.rel (%p239) target = $region36
        $region35: #{tpu_custom_call.1} parent=23 // pred_region
          %242 = vst [vmem:[%s181] sm:$0xff] 0.0
          %243 = vst [vmem:[%s181 + $0x8] sm:$0xff] 0.0
          %244 = vst [vmem:[%s181 + $0x10] sm:$0xff] 0.0
          %245 = vst [vmem:[%s181 + $0x18] sm:$0xff] 0.0
          %246 = vst [vmem:[%s181 + $0x20] sm:$0xff] 0.0
          %247 = vst [vmem:[%s181 + $0x28] sm:$0xff] 0.0
          %248 = vst [vmem:[%s181 + $0x30] sm:$0xff] 0.0
          %249 = vst [vmem:[%s181 + $0x38] sm:$0xff] 0.0
        $region36: #{tpu_custom_call.1} parent=23 // pred_fallthru
          _
        %p250 = scmp.lt.s32.totalorder %s25, 3
        %s251 = scalar_select %p250, 4, 3
        %s252 = ssub.s32 %s251, 1
        %p253 = scmp.lt.s32.totalorder %s26, %s252
        %s254 = scalar_select %p253, %s26, %s252
        %s255 = scalar_select %p250, 3, 0
        %s256 = sadd.s32 %s254, %s255
        %s257 = smul.u32 %s256, 128
        %p258 = scmp.lt.s32.totalorder %s26, %s251
        // Predicated region
        $region37: #{tpu_custom_call.1} parent=23 // pred_check
          %p259 = pneg %p258
        $region38: #{tpu_custom_call.1} parent=23 // pred_check_branch
          %261 = sbr.rel (%p259) target = $region40
        $region39: #{tpu_custom_call.1} parent=23 // pred_region
          %p262 = scmp.lt.s32.totalorder %s24, 0
          %s263 = ssub.s32 0, %s24
          %s264 = scalar_select %p262, %s263, %s24
          %s265 = sand.u32 %s264, 1
          %s266 = ssub.s32 0, %s265
          %s267 = scalar_select %p262, %s266, %s265
          %p268 = scmp.ne.s32.totalorder %s267, 0
          %p269 = scmp.lt.s32.totalorder %s267, 0
          %p270 = pnand %p269, %p268
          %p271 = pneg %p270
          %s272 = sadd.s32 %s267, 2
          %s273 = scalar_select %p271, %s272, %s267
          %s274 = sshra.s32 %s257, 7
          %s275 = sand.u32 %s257, 127
          %s276 = smul.u32 %s273, 28
          %s277 = sadd.s32 %s274, %s276
          %s278 = smul.addr %s277, 8
          %s279 = scalar_lea.vmem [#allocation2], %s278
          %v280 = vld [vmem:[%s279] sm:$0xff]
          %v281 = vld [vmem:[%s279 + $0x38] sm:$0xff]
          %v282 = vld [vmem:[%s279 + $0x70] sm:$0xff]
          %v283 = vld [vmem:[%s279 + $0xa8] sm:$0xff]
          %v284 = vld [vmem:[%s181] sm:$0xff]
          %v285 = vld [vmem:[%s181 + $0x8] sm:$0xff]
          %v286 = vld [vmem:[%s181 + $0x10] sm:$0xff]
          %v287 = vld [vmem:[%s181 + $0x18] sm:$0xff]
          %v288 = vld [vmem:[%s181 + $0x20] sm:$0xff]
          %v289 = vld [vmem:[%s181 + $0x28] sm:$0xff]
          %v290 = vld [vmem:[%s181 + $0x30] sm:$0xff]
          %v291 = vld [vmem:[%s181 + $0x38] sm:$0xff]
          %v292 = vld [vmem:[%s163] sm:$0xf]
          %v293 = vld [vmem:[%s163 + $0x4] sm:$0xf]
          %v294 = vld [vmem:[%s163 + $0x8] sm:$0xf]
          %v295 = vld [vmem:[%s163 + $0xc] sm:$0xf]
          %v296 = vld [vmem:[%s163 + $0x10] sm:$0xf]
          %v297 = vld [vmem:[%s163 + $0x14] sm:$0xf]
          %v298 = vld [vmem:[%s163 + $0x18] sm:$0xf]
          %v299 = vld [vmem:[%s163 + $0x1c] sm:$0xf]
          %v300 = vld [vmem:[%s163 + $0x20] sm:$0xf]
          %v301 = vld [vmem:[%s163 + $0x24] sm:$0xf]
          %v302 = vld [vmem:[%s163 + $0x28] sm:$0xf]
          %v303 = vld [vmem:[%s163 + $0x2c] sm:$0xf]
          %v304 = vld [vmem:[%s163 + $0x30] sm:$0xf]
          %v305 = vld [vmem:[%s163 + $0x34] sm:$0xf]
          %v306 = vld [vmem:[%s163 + $0x38] sm:$0xf]
          %v307 = vld [vmem:[%s163 + $0x3c] sm:$0xf]
          %v324 = vunpack.c.l.b16 %v292
          %v325 = vunpack.c.l.b16 %v293
          %v326 = vunpack.c.l.b16 %v294
          %v327 = vunpack.c.l.b16 %v295
          %v328 = vunpack.c.l.b16 %v296
          %v329 = vunpack.c.l.b16 %v297
          %v330 = vunpack.c.l.b16 %v298
          %v331 = vunpack.c.l.b16 %v299
          %v332 = vunpack.c.l.b16 %v300
          %v333 = vunpack.c.l.b16 %v301
          %v334 = vunpack.c.l.b16 %v302
          %v335 = vunpack.c.l.b16 %v303
          %v336 = vunpack.c.l.b16 %v304
          %v337 = vunpack.c.l.b16 %v305
          %v338 = vunpack.c.l.b16 %v306
          %v339 = vunpack.c.l.b16 %v307
          %v340 = vpack.c.b16 %v325, %v324
          %v341 = vpack.c.b16 %v327, %v326
          %v342 = vpack.c.b16 %v329, %v328
          %v343 = vpack.c.b16 %v331, %v330
          %v344 = vpack.c.b16 %v333, %v332
          %v345 = vpack.c.b16 %v335, %v334
          %v346 = vpack.c.b16 %v337, %v336
          %v347 = vpack.c.b16 %v339, %v338
          %356 = vmatprep.subr.bf16.mxu0 0
          %357 = vmatpush1.bf16.msra.mxu0 %v340
          %358 = vmatprep.subr.bf16.mxu0 0
          %359 = vmatpush1.bf16.msra.mxu0 %v341
          %360 = vmatprep.subr.bf16.mxu0 0
          %361 = vmatpush1.bf16.msra.mxu0 %v342
          %362 = vmatprep.subr.bf16.mxu0 0
          %363 = vmatpush1.bf16.msra.mxu0 %v343
          %364 = vmatprep.subr.bf16.mxu0 0
          %365 = vmatpush1.bf16.msra.mxu0 %v344
          %366 = vmatprep.subr.bf16.mxu0 0
          %367 = vmatpush1.bf16.msra.mxu0 %v345
          %368 = vmatprep.subr.bf16.mxu0 0
          %369 = vmatpush1.bf16.msra.mxu0 %v346
          %370 = vmatprep.subr.bf16.mxu0 0
          %371 = vmatpush1.bf16.msra.mxu0 %v347
          %372 = vmatprep.subr.bf16.mxu0 0
          %373 = vmatpush1.bf16.msra.mxu0 0
          %374 = vmatprep.subr.bf16.mxu0 0
          %375 = vmatpush1.bf16.msra.mxu0 0
          %376 = vmatprep.subr.bf16.mxu0 0
          %377 = vmatpush1.bf16.msra.mxu0 0
          %378 = vmatprep.subr.bf16.mxu0 0
          %379 = vmatpush1.bf16.msra.mxu0 0
          %380 = vmatprep.subr.bf16.mxu0 0
          %381 = vmatpush1.bf16.msra.mxu0 0
          %382 = vmatprep.subr.bf16.mxu0 0
          %383 = vmatpush1.bf16.msra.mxu0 0
          %384 = vmatprep.subr.bf16.mxu0 0
          %385 = vmatpush1.bf16.msra.mxu0 0
          %386 = vmatprep.subr.bf16.mxu0 0
          %387 = vmatpush1.bf16.msra.mxu0 0
          %388 = vmatprep.mubr.bf16.mxu0 0
          %389 = vmatmul.mubr.bf16.gmra.mrb[0].mxu0 %v280
          %v390 = vpop.f32.mrb[0].mxu0
          %v391 = vadd.f32 0.0, %v390
          %v392 = vpop.f32.mrb[0].mxu0
          %v393 = vpop.f32.mrb[0].mxu0
          %v394 = vadd.f32 0.0, %v393
          %v395 = vpop.f32.mrb[0].mxu0
          %396 = vmatprep.mubr.bf16.mxu0 0
          %397 = vmatmul.mubr.bf16.gmra.mrb[0].mxu0 %v281
          %v398 = vpop.f32.mrb[0].mxu0
          %v399 = vadd.f32 0.0, %v398
          %v400 = vpop.f32.mrb[0].mxu0
          %v401 = vpop.f32.mrb[0].mxu0
          %v402 = vadd.f32 0.0, %v401
          %v403 = vpop.f32.mrb[0].mxu0
          %404 = vmatprep.mubr.bf16.mxu0 0
          %405 = vmatmul.mubr.bf16.gmra.mrb[0].mxu0 %v282
          %v406 = vpop.f32.mrb[0].mxu0
          %v407 = vadd.f32 0.0, %v406
          %v408 = vpop.f32.mrb[0].mxu0
          %v409 = vpop.f32.mrb[0].mxu0
          %v410 = vadd.f32 0.0, %v409
          %v411 = vpop.f32.mrb[0].mxu0
          %412 = vmatprep.mubr.bf16.mxu0 0
          %413 = vmatmul.mubr.bf16.gmra.mrb[0].mxu0 %v283
          %v414 = vpop.f32.mrb[0].mxu0
          %v415 = vadd.f32 0.0, %v414
          %v416 = vpop.f32.mrb[0].mxu0
          %v417 = vpop.f32.mrb[0].mxu0
          %v418 = vadd.f32 0.0, %v417
          %v419 = vpop.f32.mrb[0].mxu0
          %420 = vdwg.mxu0
          %v421 = vadd.f32 %v284, %v391
          %v422 = vadd.f32 %v285, %v394
          %v423 = vadd.f32 %v286, %v399
          %v424 = vadd.f32 %v287, %v402
          %v425 = vadd.f32 %v288, %v407
          %v426 = vadd.f32 %v289, %v410
          %v427 = vadd.f32 %v290, %v415
          %v428 = vadd.f32 %v291, %v418
          %429 = vst [vmem:[%s181] sm:$0xff] %v421
          %430 = vst [vmem:[%s181 + $0x8] sm:$0xff] %v422
          %431 = vst [vmem:[%s181 + $0x10] sm:$0xff] %v423
          %432 = vst [vmem:[%s181 + $0x18] sm:$0xff] %v424
          %433 = vst [vmem:[%s181 + $0x20] sm:$0xff] %v425
          %434 = vst [vmem:[%s181 + $0x28] sm:$0xff] %v426
          %435 = vst [vmem:[%s181 + $0x30] sm:$0xff] %v427
          %436 = vst [vmem:[%s181 + $0x38] sm:$0xff] %v428
        $region40: #{tpu_custom_call.1} parent=23 // pred_fallthru
          _
        %p437 = scmp.eq.s32.totalorder %s26, 3
        // Predicated region
        $region41: #{tpu_custom_call.1} parent=23 // pred_check
          %p438 = pneg %p437
        $region42: #{tpu_custom_call.1} parent=23 // pred_check_branch
          %440 = sbr.rel (%p438) target = $region44
        $region43: #{tpu_custom_call.1} parent=23 // pred_region
          %s441 = smul.u32 %s25, 128
          %v442 = vld [vmem:[%s181] sm:$0xff]
          %v443 = vld [vmem:[%s181 + $0x8] sm:$0xff]
          %v444 = vld [vmem:[%s181 + $0x10] sm:$0xff]
          %v445 = vld [vmem:[%s181 + $0x18] sm:$0xff]
          %v446 = vld [vmem:[%s181 + $0x20] sm:$0xff]
          %v447 = vld [vmem:[%s181 + $0x28] sm:$0xff]
          %v448 = vld [vmem:[%s181 + $0x30] sm:$0xff]
          %v449 = vld [vmem:[%s181 + $0x38] sm:$0xff]
          %v450 = vpack.c.bf16 %v443, %v442
          %v451 = vpack.c.bf16 %v445, %v444
          %v452 = vpack.c.bf16 %v447, %v446
          %v453 = vpack.c.bf16 %v449, %v448
          %s454 = sadd.s32 %s24, 1
          %p455 = scmp.lt.s32.totalorder %s454, 0
          %s456 = ssub.s32 0, %s454
          %s457 = scalar_select %p455, %s456, %s454
          %s458 = sand.u32 %s457, 1
          %s459 = ssub.s32 0, %s458
          %s460 = scalar_select %p455, %s459, %s458
          %p461 = scmp.ne.s32.totalorder %s460, 0
          %p462 = scmp.lt.s32.totalorder %s460, 0
          %p463 = pnand %p462, %p461
          %p464 = pneg %p463
          %s465 = sadd.s32 %s460, 2
          %s466 = scalar_select %p464, %s465, %s460
          %s467 = sshra.s32 %s441, 7
          %s468 = sand.u32 %s441, 127
          %s469 = smul.u32 %s466, 28
          %s470 = sadd.s32 %s467, %s469
          %s471 = smul.addr %s470, 8
          %s472 = scalar_lea.vmem [#allocation2], %s471
          %473 = vst [vmem:[%s472] sm:$0xff] %v450
          %474 = vst [vmem:[%s472 + $0x38] sm:$0xff] %v451
          %475 = vst [vmem:[%s472 + $0x70] sm:$0xff] %v452
          %476 = vst [vmem:[%s472 + $0xa8] sm:$0xff] %v453
        $region44: #{tpu_custom_call.1} parent=23 // pred_fallthru
          _
        %s477 = sand.u32 %s90, 1
        %s478 = scalar_lea.sflag [#allocation6], %s477
        %s479 = sand.u32 %s90, 1
        %s480 = smul.addr %s479, 64
        %s481 = scalar_lea.vmem [#allocation7], %s480
        // Predicated region
        $region45: #{tpu_custom_call.1} parent=23 // pred_check
          %p482 = pneg %p100
        $region46: #{tpu_custom_call.1} parent=23 // pred_check_branch
          %484 = sbr.rel (%p482) target = $region48
        $region47: #{tpu_custom_call.1} parent=23 // pred_region
          %s486 = ssub.s32 1024, 1024
          %487 = vsyncadd %s478, %s486
          %s488 = smul.addr %s24, 56
          %s489 = sadd.s32 %s25, %s488
          %s490 = smul.addr %s489, 128
          %s491 = scalar_lea.hbm %s2, %s490
          %s492 = sshll.u32 %s481, 4
          %s493 = int_to_ptr.vmem [resolvable:$true] %s492
          %498 = dma.vmem_to_hbm [thread:$0]  %s493, 1024, %s491, %s478, 128, 896, 8
        $region48: #{tpu_custom_call.1} parent=23 // pred_fallthru
          _
      $region24: #{tpu_custom_call.1} parent=5 // pred_fallthru
        _
      %p499 = scmp.le.s32.totalorder 2, %s14
      // Predicated region
      $region49: #{tpu_custom_call.1} parent=5 // pred_check
        %p500 = pneg %p499
      $region50: #{tpu_custom_call.1} parent=5 // pred_check_branch
        %502 = sbr.rel (%p500) target = $region52
      $region51: #{tpu_custom_call.1} parent=5 // pred_region
        %s503 = ssub.s32 %s14, 2
        // Predicated region
        $region53: #{tpu_custom_call.1} parent=51 // pred_check
          %p504 = pneg %p106
        $region54: #{tpu_custom_call.1} parent=51 // pred_check_branch
          %506 = sbr.rel (%p504) target = $region56
        $region55: #{tpu_custom_call.1} parent=51 // pred_region
          %s507 = sand.u32 %s91, 1
          %s508 = scalar_lea.sflag [#allocation6], %s507
          %s509 = sand.u32 %s91, 1
          %s510 = smul.addr %s509, 64
          %s511 = scalar_lea.vmem [#allocation7], %s510
          %512 = dma.done %s508, 1024
        $region56: #{tpu_custom_call.1} parent=51 // pred_fallthru
          _
      $region52: #{tpu_custom_call.1} parent=5 // pred_fallthru
        _
    $region6: #{tpu_custom_call.1} parent=1 // loop_footer
      %s18 = sadd.s32 1, %s14
    $region7: #{tpu_custom_call.1} parent=1 // loop_footer_branch
      %13 = sbr.rel target = $region3
    $region8: #{tpu_custom_call.1} parent=1 // loop_exit
      _
    %513 = vsyncpa [#allocation5], 1
    %s514 = scalar_lea.sflag [#allocation5], 1
    %515 = vsyncpa %s514, 1
    %516 = vsyncpa [#allocation6], 1
    %s517 = scalar_lea.sflag [#allocation6], 1
    %518 = vsyncpa %s517, 1
  %519 = vsyncmov [#allocation3]
  %s520 = vpop.sfrf %519
  %p521 = scmp.eq.s32.totalorder %s520, 0
  %p522 = pneg %p521
  %524 = shalt.err (%p522)

</llo_original>
